<compile_context>
chip_gen: v6e
topology: v6e:2x2x1
jax: 0.10.0
libtpu: 0.0.40
codegen_flags: <defaults>
</compile_context>

<pallas_src>
import functools

import jax
import jax.numpy as jnp
from jax.experimental import pallas as pl
from jax.experimental.pallas import tpu as pltpu


def _round_up(v: int, m: int) -> int:
    return ((v + m - 1) // m) * m


def _int8_mxu_available() -> bool:
    """True on TPU generations with an integer MXU path (v5e/v5p/v6e). v7x is bf16/fp8-only."""
    try:
        kind = jax.devices()[0].device_kind.lower()
    except Exception:
        return False
    return any(tag in kind for tag in ("v5", "v6"))


def _tb1x1_kernel(x_ref, w_ref, s_ref, off_ref, o_ref, *, shift_n: int, relu: bool, int_mxu: bool):
    # x_ref  : (T, L_in)   int8 / f32  activations (fold rows packed per 128-lane row)
    # w_ref  : (L_in, L_out) int8 / bf16 block-diagonal 1x1 weight
    # s_ref  : (1, L_out)  int32  per-channel scale (tiled over the fold groups)
    # off_ref: (1, L_out)  int32  bias*scale + round_shift (pre-folded)
    # o_ref  : (T, L_out)  out_dtype
    if int_mxu:
        # Native int8 x int8 -> int32 MXU (v5e/v6e): exact psum, no VPU convert chain.
        psum_i = jnp.dot(x_ref[...], w_ref[...], preferred_element_type=jnp.int32)
    else:
        # bf16 MXU path (v7x has no integer MXU; also used for float inputs).
        # bf16 is exact for int8-range values; f32 accumulation is exact while |psum| < 2^24
        # (asserted in the wrapper).  TODO(synk): check whether a direct int8->bf16 convert
        # lowers as a single op on v7x so the f32 hop can be dropped.
        x = x_ref[...].astype(jnp.float32).astype(jnp.bfloat16)
        psum_i = jnp.dot(x, w_ref[...], preferred_element_type=jnp.float32).astype(jnp.int32)

    # (psum + bias) * scale + round_shift  ==  psum*scale + (bias*scale + round_shift)
    mul_i = psum_i * s_ref[...] + off_ref[...]
    shifted = mul_i >> shift_n                    # arithmetic shift on signed int32
    lo = 0 if relu else -128                      # clamp(-128,127) + relu fused into one clip
    o_ref[...] = jnp.clip(shifted, lo, 127).astype(o_ref.dtype)


def tb_module_1x1_fwd(x, weight, bias, scale, *, shift_n=8, relu=True,
                      tile_rows=4096, out_dtype=jnp.float32):
    """x:(N,IC) int8 or integer-valued float, weight:(IC,OC), bias,scale:(OC,) -> (N,OC) out_dtype."""
    x = jnp.asarray(x)
    N, IC = x.shape
    weight = jnp.asarray(weight)
    assert weight.shape[0] == IC
    OC = weight.shape[1]

    float_input = jnp.issubdtype(x.dtype, jnp.floating)

    # --- integer parameter views -------------------------------------------------------------
    w_i = jnp.round(weight.astype(jnp.float32)).astype(jnp.int32)
    b_i = jnp.round(jnp.asarray(bias, jnp.float32)).astype(jnp.int32).reshape(1, OC)
    s_i = jnp.round(jnp.asarray(scale, jnp.float32)).astype(jnp.int32).reshape(1, OC)
    round_shift = 1 << (shift_n - 1)

    # --- worst-case range checks (tiny arrays, eager) ----------------------------------------
    w_min = int(jnp.min(w_i))
    w_max = int(jnp.max(w_i))
    max_abs_w = max(abs(w_min), abs(w_max))
    max_abs_b = int(jnp.max(jnp.abs(b_i)))
    max_abs_s = int(jnp.max(jnp.abs(s_i)))
    max_abs_x = 128                                       # int8-range activations (module contract)
    psum_bound = IC * max_abs_x * max_abs_w
    requant_bound = (psum_bound + max_abs_b) * max_abs_s + round_shift
    # Requantization is done in int32 (PyTorch uses int64); exact only under this bound.
    # TODO(synk): add an int64-emulation requant path for layers that violate it.
    assert requant_bound < 2 ** 31, (
        f"int32 requantization would overflow: worst case {requant_bound} >= 2^31")

    int_mxu = (not float_input) and _int8_mxu_available() and (w_min >= -128) and (w_max <= 127)
    if not int_mxu:
        # Exactness preconditions of the bf16/f32 MXU path.
        assert max_abs_w <= 256, "weights not exactly representable in bf16"
        assert psum_bound < 2 ** 24, "f32 accumulation would lose integer exactness"

    # --- lane-dense folding: pack `fold` feature rows per 128-lane-multiple row ---------------
    fold = 1
    for f in (1, 2, 4, 8, 16, 32, 64, 128):
        if (IC * f) % 128 == 0 and (OC * f) % 128 == 0:
            fold = f
            break
    L_in, L_out = IC * fold, OC * fold

    w_bd = jnp.kron(jnp.eye(fold, dtype=jnp.int32), w_i) if fold > 1 else w_i
    w_k = w_bd.astype(jnp.int8) if int_mxu else w_bd.astype(jnp.bfloat16)

    off_i = b_i * s_i + round_shift                       # exact int32 under requant_bound check
    s_tiled = jnp.tile(s_i, (1, fold))
    off_tiled = jnp.tile(off_i, (1, fold))

    # Activations: int8 in HBM when the input is integer (4x less read traffic on this mem-bound
    # kernel); float inputs are passed straight through and cast inside the kernel block.
    x_k = x if float_input else x.astype(jnp.int8)

    # Pad only the <= (fold-1) tail rows needed for the fold reshape; the ragged last grid block
    # is handled by Pallas (out-of-bounds output rows are dropped on writeback).
    pad_feat = (-N) % fold
    if pad_feat:
        x_k = jnp.pad(x_k, ((0, pad_feat), (0, 0)))
    n_fold = x_k.shape[0] // fold
    x_folded = x_k.reshape(n_fold, L_in)                  # row-major contiguous -> cheap

    # Big tiles amortise the ~0.35us per-grid-step overhead; cap so the grid stays >= 2 steps
    # where possible (keeps both v7x TensorCores busy) and rows stay a multiple of 32 (int8
    # sublane tiling).  Double-buffered VMEM at 4096 rows is ~5 MiB -> fits every generation.
    tile_rows = max(32, min(int(tile_rows), _round_up(pl.cdiv(n_fold, 2), 32)))
    tile_rows = _round_up(tile_rows, 32)
    grid = (pl.cdiv(n_fold, tile_rows),)

    kernel = functools.partial(_tb1x1_kernel, shift_n=shift_n, relu=relu, int_mxu=int_mxu)

    out_folded = pl.pallas_call(
        kernel,
        out_shape=jax.ShapeDtypeStruct((n_fold, L_out), out_dtype),
        grid_spec=pltpu.PrefetchScalarGridSpec(
            num_scalar_prefetch=0,
            grid=grid,
            in_specs=[
                pl.BlockSpec((tile_rows, L_in), lambda i: (i, 0)),   # activations (lane-dense)
                pl.BlockSpec((L_in, L_out), lambda i: (0, 0)),       # block-diag 1x1 weight
                pl.BlockSpec((1, L_out), lambda i: (0, 0)),          # scale (int32)
                pl.BlockSpec((1, L_out), lambda i: (0, 0)),          # bias*scale + round_shift
            ],
            out_specs=pl.BlockSpec((tile_rows, L_out), lambda i: (i, 0)),
        ),
        compiler_params=pltpu.CompilerParams(
            # TODO(synk): on v7x an explicit CORE_PARALLEL leading axis could force the 2-TC
            # split; plain "parallel" with grid >= 2 is the portable choice here.
            dimension_semantics=("parallel",),
            vmem_limit_bytes=48 * 1024 * 1024,
        ),
    )(x_folded, w_k, s_tiled, off_tiled)

    # Unfold; strip only the (<= fold-1) tail rows added for the fold reshape.
    out = out_folded.reshape(n_fold * fold, OC)
    if pad_feat:
        out = out[:N]
    return out


def _reference(x, weight, bias, scale, shift_n=8, relu=True):
    """Pure-JAX reference following the PyTorch requant semantics (int32-exact for these ranges)."""
    xf = jnp.asarray(x, jnp.float32)
    wf = jnp.round(jnp.asarray(weight, jnp.float32))
    psum_i = (xf @ wf).astype(jnp.int32)
    b = jnp.round(jnp.asarray(bias, jnp.float32)).astype(jnp.int32)[None, :]
    s = jnp.round(jnp.asarray(scale, jnp.float32)).astype(jnp.int32)[None, :]
    mul = (psum_i + b) * s + (1 << (shift_n - 1))
    shifted = mul >> shift_n
    out = jnp.clip(shifted, -128, 127).astype(jnp.float32)
    if relu:
        out = jnp.maximum(out, 0.0)
    return out


if __name__ == "__main__":
    key = jax.random.PRNGKey(0)
    k1, k2, k3, k4 = jax.random.split(key, 4)

    IC, OC, shift_n = 32, 32, 8

    # __init__-shaped integer parameters (int8-range weights, 16-bit-ish bias, small scales).
    weight = jax.random.randint(k1, (IC, OC), -128, 128).astype(jnp.float32)
    bias = jax.random.randint(k2, (OC,), -2048, 2048).astype(jnp.float32)
    scale = jax.random.randint(k3, (OC,), 1, 64).astype(jnp.float32)

    ok = True
    # (N=300, int8)  -> ragged fold + ragged grid, int8-MXU path on v5/v6
    # (N=256, int8)  -> exactly divisible path
    # (N=300, float) -> float-input / bf16-MXU path
    for N, as_float in ((300, False), (256, False), (300, True)):
        xi = jax.random.randint(k4, (N, IC), -128, 128).astype(jnp.int8)
        x = xi.astype(jnp.float32) if as_float else xi

        out = tb_module_1x1_fwd(x, weight, bias, scale, shift_n=shift_n, relu=True)
        out = jax.block_until_ready(out)

        ref = _reference(xi, weight, bias, scale, shift_n=shift_n, relu=True)
        assert out.shape == (N, OC) and out.dtype == jnp.float32
        ok = ok and bool(jnp.array_equal(out, ref))
        assert ok, f"mismatch vs reference at N={N}, float_input={as_float}"

    print("KERNEL_OK")
</pallas_src>

<mosaic_0001>
module attributes {stable_mosaic.version = 11 : i64} {
  func.func @_tb1x1_kernel(%arg0: i32, %arg1: memref<64x128xi8, #tpu.memory_space<vmem>>, %arg2: memref<128x128xbf16, #tpu.memory_space<vmem>>, %arg3: memref<1x128xi32, #tpu.memory_space<vmem>>, %arg4: memref<1x128xi32, #tpu.memory_space<vmem>>, %arg5: memref<64x128xf32, #tpu.memory_space<vmem>>) attributes {dimension_semantics = [#tpu.dimension_semantics<parallel>], iteration_bounds = array<i64: 2>, scalar_prefetch = 0 : i64, scratch_operands = 0 : i64, tpu.core_type = #tpu.core_type<tc>, window_params = [{transform_indices = @transform_0, window_bounds = array<i64: 64, 128>}, {pipeline_mode = #tpu.pipeline_mode<synchronous>, transform_indices = @transform_1, window_bounds = array<i64: 128, 128>}, {pipeline_mode = #tpu.pipeline_mode<synchronous>, transform_indices = @transform_2, window_bounds = array<i64: 1, 128>}, {pipeline_mode = #tpu.pipeline_mode<synchronous>, transform_indices = @transform_3, window_bounds = array<i64: 1, 128>}, {transform_indices = @transform_4, window_bounds = array<i64: 64, 128>}]} {
    %c0 = arith.constant 0 : index
    %c0_0 = arith.constant 0 : index
    %0 = vector.load %arg1[%c0, %c0_0] : memref<64x128xi8, #tpu.memory_space<vmem>>, vector<64x128xi8>
    %1 = arith.sitofp %0 : vector<64x128xi8> to vector<64x128xf32>
    %2 = arith.truncf %1 : vector<64x128xf32> to vector<64x128xbf16>
    %c0_1 = arith.constant 0 : index
    %c0_2 = arith.constant 0 : index
    %3 = vector.load %arg2[%c0_1, %c0_2] : memref<128x128xbf16, #tpu.memory_space<vmem>>, vector<128x128xbf16>
    %cst = arith.constant dense<0.000000e+00> : vector<64x128xf32>
    %4 = tpu.matmul %2, %3, %cst {dimension_numbers = #tpu.dot_dimension_numbers<[1], [0], [0], [1], [0, 0, 1, 1], [], []>} : vector<64x128xbf16>, vector<128x128xbf16>, vector<64x128xf32> -> vector<64x128xf32>
    %5 = arith.fptosi %4 : vector<64x128xf32> to vector<64x128xi32>
    %c0_3 = arith.constant 0 : index
    %c0_4 = arith.constant 0 : index
    %6 = vector.load %arg3[%c0_3, %c0_4] : memref<1x128xi32, #tpu.memory_space<vmem>>, vector<1x128xi32>
    %7 = vector.broadcast %6 : vector<1x128xi32> to vector<64x128xi32>
    %8 = arith.muli %5, %7 : vector<64x128xi32>
    %c0_5 = arith.constant 0 : index
    %c0_6 = arith.constant 0 : index
    %9 = vector.load %arg4[%c0_5, %c0_6] : memref<1x128xi32, #tpu.memory_space<vmem>>, vector<1x128xi32>
    %10 = vector.broadcast %9 : vector<1x128xi32> to vector<64x128xi32>
    %11 = arith.addi %8, %10 : vector<64x128xi32>
    %c8_i32 = arith.constant 8 : i32
    %12 = vector.broadcast %c8_i32 : i32 to vector<64x128xi32>
    %13 = arith.shrsi %11, %12 : vector<64x128xi32>
    %c0_i32 = arith.constant 0 : i32
    %c127_i32 = arith.constant 127 : i32
    %14 = vector.broadcast %c0_i32 : i32 to vector<64x128xi32>
    %15 = arith.maxsi %14, %13 : vector<64x128xi32>
    %16 = vector.broadcast %c127_i32 : i32 to vector<64x128xi32>
    %17 = arith.minsi %16, %15 : vector<64x128xi32>
    %18 = arith.sitofp %17 : vector<64x128xi32> to vector<64x128xf32>
    %c0_7 = arith.constant 0 : index
    %c0_8 = arith.constant 0 : index
    %19 = vector.load %arg5[%c0_7, %c0_8] : memref<64x128xf32, #tpu.memory_space<vmem>>, vector<64x128xf32>
    tpu.vector_store %arg5[%c0_7, %c0_8], %18 {strides = array<i32>} : memref<64x128xf32, #tpu.memory_space<vmem>>, vector<64x128xf32>,
    return
  }
  func.func @transform_0(%arg0: i32) -> (i32, i32) {
    %c0_i32 = arith.constant 0 : i32
    %c0_i32_0 = arith.constant 0 : i32
    return %arg0, %c0_i32 : i32, i32
  }
  func.func @transform_1(%arg0: i32) -> (i32, i32) {
    %c0_i32 = arith.constant 0 : i32
    %c0_i32_0 = arith.constant 0 : i32
    %c0_i32_1 = arith.constant 0 : i32
    return %c0_i32, %c0_i32_0 : i32, i32
  }
  func.func @transform_2(%arg0: i32) -> (i32, i32) {
    %c0_i32 = arith.constant 0 : i32
    %c0_i32_0 = arith.constant 0 : i32
    %c0_i32_1 = arith.constant 0 : i32
    return %c0_i32, %c0_i32_0 : i32, i32
  }
  func.func @transform_3(%arg0: i32) -> (i32, i32) {
    %c0_i32 = arith.constant 0 : i32
    %c0_i32_0 = arith.constant 0 : i32
    %c0_i32_1 = arith.constant 0 : i32
    return %c0_i32, %c0_i32_0 : i32, i32
  }
  func.func @transform_4(%arg0: i32) -> (i32, i32) {
    %c0_i32 = arith.constant 0 : i32
    %c0_i32_0 = arith.constant 0 : i32
    return %arg0, %c0_i32 : i32, i32
  }
}

</mosaic_0001>

<llo_original>
// kernel: tpu_custom_call.1
$region0: #{tpu_custom_call.1}
  #allocation0 [shape = 'u32[]', space=smem, size = 0x4, offset = 0x4, fixed_abs, tag = 'smem constant byte address 0x4 - core index']
  #allocation1 [shape = 'u32[144,128]{1,0:T(1,128)}', space=vmem, size = 0x12000, scoped, tag = 'internal scratch']
  %s0 = inlined_call_operand.hbm [shape: s8[75,128], index: 0, kind: input, shape index: {}]
  %s1 = inlined_call_operand.hbm [shape: bf16[128,128], index: 1, kind: input, shape index: {}]
  %s2 = inlined_call_operand.vmem [shape: s32[1,128], index: 2, kind: input, shape index: {}]
  %s3 = inlined_call_operand.vmem [shape: s32[1,128], index: 3, kind: input, shape index: {}]
  %s4 = inlined_call_operand.hbm [shape: f32[75,128], index: 4, kind: output, shape index: {}]
  %s5 = sld [smem:[#allocation0]]
  $region57: #{tpu_custom_call.1} parent=0
    _
  %s7 = ssub.s32 1, %s5
  %s8 = scalar_select 0, %s7, %s5
  $region1: #{tpu_custom_call.1} parent=0
    #allocation2 [shape = 'u8[16384]{0}', space=vmem, size = 0x4000, scoped, tag = 'input window, operand 0']
    #allocation3 [shape = 's32[2]{0}', space=sflag, size = 0x8, scoped, tag = 'scoped memory for tpu_custom_call.1']
    #allocation4 [shape = 's32[2]{0}', space=sflag, size = 0x8, scoped, tag = 'scoped memory for tpu_custom_call.1']
    #allocation5 [shape = 'u8[32768]{0}', space=vmem, size = 0x8000, scoped, tag = 'input window, operand 1, single buffered']
    #allocation6 [shape = 's32[1]{0}', space=sflag, size = 0x4, scoped, tag = 'scoped memory for tpu_custom_call.1']
    #allocation7 [shape = 'u8[65536]{0}', space=vmem, size = 0x10000, scoped, tag = 'output window, operand 0']
    %9 = vsyncpa [#allocation3], 0
    %s10 = scalar_lea.sflag [#allocation3], 1
    %11 = vsyncpa %s10, 0
    %12 = vsyncpa [#allocation6], 0
    %13 = vsyncpa [#allocation4], 0
    %s14 = scalar_lea.sflag [#allocation4], 1
    %15 = vsyncpa %s14, 0
    loop: start=0, step=1, limit=4
    $region2: #{tpu_custom_call.1} parent=1 // loop_pre_header
      _
    $region3: #{tpu_custom_call.1} parent=1 // loop_header
      %s17 = sphi 0, %s21
      %p18 = scmp.ge.s32.totalorder %s17, 4
      %s27 = sphi 0, %s29
      %s30 = sphi 0, %s27
      %s31 = sphi 0, %s30
      %s47 = sphi 0, %s31
      %s51 = sphi 0, %s51
      %s53 = sphi 0, %s51
      %s54 = sphi 0, %s53
      %s68 = sphi 0, %s54
      %s72 = sphi 0, %s72
      %s74 = sphi 0, %s72
      %s75 = sphi 0, %s74
      %s89 = sphi 0, %s75
      %s93 = sphi 0, %s93
      %s95 = sphi 0, %s93
      %s96 = sphi 0, %s95
      %s110 = sphi 0, %s96
      %s116 = sphi 0, %s118
      %s119 = sphi 0, %s116
      %s120 = sphi 0, %s119
      %s136 = sphi 0, %s120
    $region4: #{tpu_custom_call.1} parent=1 // loop_header_branch
      %20 = sbr.rel (%p18) target = $region8
    $region5: #{tpu_custom_call.1} parent=1 // loop_body
      %s22 = ssub.s32 %s17, 1
      %s23 = ssub.s32 %s17, 2
      %s24 = sadd.s32 %s17, 1
      %s25 = ssub.s32 %s17, %s24
      %p26 = scmp.eq.s32.totalorder %s25, 0
      %s28 = sadd.s32 %s27, 1
      %s29 = scalar_select %p26, %s27, %s28
      %p32 = pneg %p26
      %p33 = scmp.eq.s32.totalorder %s17, 1
      %p34 = por %p32, %p33
      %p35 = scmp.ne.s32.totalorder %s27, %s30
      %p36 = scmp.eq.s32.totalorder %s17, 0
      %p37 = por %p35, %p36
      %p38 = scmp.ne.s32.totalorder %s27, %s30
      %p39 = scmp.eq.s32.totalorder %s22, 1
      %p40 = por %p38, %p39
      %p41 = scmp.ne.s32.totalorder %s30, %s31
      %p42 = scmp.eq.s32.totalorder %s22, 0
      %p43 = por %p41, %p42
      %p44 = scmp.ne.s32.totalorder %s30, %s31
      %p45 = scmp.eq.s32.totalorder %s23, 1
      %p46 = por %p44, %p45
      %p48 = scmp.ne.s32.totalorder %s31, %s47
      %p49 = scmp.eq.s32.totalorder %s23, 0
      %p50 = por %p48, %p49
      %s52 = sadd.s32 %s51, 1
      %p55 = scmp.eq.s32.totalorder %s17, 1
      %p56 = scmp.ne.s32.totalorder %s51, %s53
      %p57 = scmp.eq.s32.totalorder %s17, 0
      %p58 = por %p56, %p57
      %p59 = scmp.ne.s32.totalorder %s51, %s53
      %p60 = scmp.eq.s32.totalorder %s22, 1
      %p61 = por %p59, %p60
      %p62 = scmp.ne.s32.totalorder %s53, %s54
      %p63 = scmp.eq.s32.totalorder %s22, 0
      %p64 = por %p62, %p63
      %p65 = scmp.ne.s32.totalorder %s53, %s54
      %p66 = scmp.eq.s32.totalorder %s23, 1
      %p67 = por %p65, %p66
      %p69 = scmp.ne.s32.totalorder %s54, %s68
      %p70 = scmp.eq.s32.totalorder %s23, 0
      %p71 = por %p69, %p70
      %s73 = sadd.s32 %s72, 1
      %p76 = scmp.eq.s32.totalorder %s17, 1
      %p77 = scmp.ne.s32.totalorder %s72, %s74
      %p78 = scmp.eq.s32.totalorder %s17, 0
      %p79 = por %p77, %p78
      %p80 = scmp.ne.s32.totalorder %s72, %s74
      %p81 = scmp.eq.s32.totalorder %s22, 1
      %p82 = por %p80, %p81
      %p83 = scmp.ne.s32.totalorder %s74, %s75
      %p84 = scmp.eq.s32.totalorder %s22, 0
      %p85 = por %p83, %p84
      %p86 = scmp.ne.s32.totalorder %s74, %s75
      %p87 = scmp.eq.s32.totalorder %s23, 1
      %p88 = por %p86, %p87
      %p90 = scmp.ne.s32.totalorder %s75, %s89
      %p91 = scmp.eq.s32.totalorder %s23, 0
      %p92 = por %p90, %p91
      %s94 = sadd.s32 %s93, 1
      %p97 = scmp.eq.s32.totalorder %s17, 1
      %p98 = scmp.ne.s32.totalorder %s93, %s95
      %p99 = scmp.eq.s32.totalorder %s17, 0
      %p100 = por %p98, %p99
      %p101 = scmp.ne.s32.totalorder %s93, %s95
      %p102 = scmp.eq.s32.totalorder %s22, 1
      %p103 = por %p101, %p102
      %p104 = scmp.ne.s32.totalorder %s95, %s96
      %p105 = scmp.eq.s32.totalorder %s22, 0
      %p106 = por %p104, %p105
      %p107 = scmp.ne.s32.totalorder %s95, %s96
      %p108 = scmp.eq.s32.totalorder %s23, 1
      %p109 = por %p107, %p108
      %p111 = scmp.ne.s32.totalorder %s96, %s110
      %p112 = scmp.eq.s32.totalorder %s23, 0
      %p113 = por %p111, %p112
      %s114 = ssub.s32 %s17, %s24
      %p115 = scmp.eq.s32.totalorder %s114, 0
      %s117 = sadd.s32 %s116, 1
      %s118 = scalar_select %p115, %s116, %s117
      %p121 = pneg %p115
      %p122 = scmp.eq.s32.totalorder %s17, 1
      %p123 = por %p121, %p122
      %p124 = scmp.ne.s32.totalorder %s116, %s119
      %p125 = scmp.eq.s32.totalorder %s17, 0
      %p126 = por %p124, %p125
      %p127 = scmp.ne.s32.totalorder %s116, %s119
      %p128 = scmp.eq.s32.totalorder %s22, 1
      %p129 = por %p127, %p128
      %p130 = scmp.ne.s32.totalorder %s119, %s120
      %p131 = scmp.eq.s32.totalorder %s22, 0
      %p132 = por %p130, %p131
      %p133 = scmp.ne.s32.totalorder %s119, %s120
      %p134 = scmp.eq.s32.totalorder %s23, 1
      %p135 = por %p133, %p134
      %p137 = scmp.ne.s32.totalorder %s120, %s136
      %p138 = scmp.eq.s32.totalorder %s23, 0
      %p139 = por %p137, %p138
      %p140 = scmp.le.s32.totalorder 1, %s17
      %p141 = scmp.lt.s32.totalorder %s17, 3
      %p142 = pnand %p140, %p141
      %p143 = pneg %p142
      // Predicated region
      $region9: #{tpu_custom_call.1} parent=5 // pred_check
        _
      $region10: #{tpu_custom_call.1} parent=5 // pred_check_branch
        %145 = sbr.rel (%p142) target = $region12
      $region11: #{tpu_custom_call.1} parent=5 // pred_region
        %s146 = ssub.s32 %s17, 1
        // Predicated region
        $region13: #{tpu_custom_call.1} parent=11 // pred_check
          %p147 = pneg %p64
        $region14: #{tpu_custom_call.1} parent=11 // pred_check_branch
          %149 = sbr.rel (%p147) target = $region16
        $region15: #{tpu_custom_call.1} parent=11 // pred_region
          %s151 = ssub.s32 1024, 1024
          %152 = vsyncadd [#allocation6], %s151
          %s153 = sshll.u32 [#allocation5], 4
          %s154 = int_to_ptr.vmem [resolvable:$true] %s153
          %159 = dma.hbm_to_vmem [thread:$0]  %s1, 1024, %s154, [#allocation6], 64, 64, 4
        $region16: #{tpu_custom_call.1} parent=11 // pred_fallthru
          _
        // Predicated region
        $region17: #{tpu_custom_call.1} parent=11 // pred_check
          %p160 = pneg %p85
        $region18: #{tpu_custom_call.1} parent=11 // pred_check_branch
          %162 = sbr.rel (%p160) target = $region20
        $region19: #{tpu_custom_call.1} parent=11 // pred_region
          _
        $region20: #{tpu_custom_call.1} parent=11 // pred_fallthru
          _
        // Predicated region
        $region21: #{tpu_custom_call.1} parent=11 // pred_check
          %p163 = pneg %p106
        $region22: #{tpu_custom_call.1} parent=11 // pred_check_branch
          %165 = sbr.rel (%p163) target = $region24
        $region23: #{tpu_custom_call.1} parent=11 // pred_region
          _
        $region24: #{tpu_custom_call.1} parent=11 // pred_fallthru
          _
      $region12: #{tpu_custom_call.1} parent=5 // pred_fallthru
        _
      %p166 = scmp.lt.s32.totalorder %s17, 2
      // Predicated region
      $region25: #{tpu_custom_call.1} parent=5 // pred_check
        %p167 = pneg %p166
      $region26: #{tpu_custom_call.1} parent=5 // pred_check_branch
        %169 = sbr.rel (%p167) target = $region28
      $region27: #{tpu_custom_call.1} parent=5 // pred_region
        // Predicated region
        $region29: #{tpu_custom_call.1} parent=27 // pred_check
          %p170 = pneg %p37
        $region30: #{tpu_custom_call.1} parent=27 // pred_check_branch
          %172 = sbr.rel (%p170) target = $region32
        $region31: #{tpu_custom_call.1} parent=27 // pred_region
          %s173 = sand.u32 %s27, 1
          %s174 = scalar_lea.sflag [#allocation3], %s173
          %s175 = sand.u32 %s27, 1
          %s176 = smul.addr %s175, 16
          %s177 = scalar_lea.vmem [#allocation2], %s176
          %s178 = smul.u32 8, %s17
          %s179 = ssub.s32 10, %s178
          %p180 = scmp.lt.s32.totalorder %s179, 8
          %s181 = scalar_select %p180, %s179, 8
          %s182 = smul.u32 32, %s181
          %s184 = ssub.s32 256, %s182
          %185 = vsyncadd %s174, %s184
          %p186 = scmp.ne.s32.totalorder 0, %s182
          %s187 = smul.addr %s178, 32
          %s188 = scalar_lea.hbm %s0, %s187
          %s189 = smul.u32 2, %s181
          %s190 = sshll.u32 %s177, 4
          %s191 = int_to_ptr.vmem [resolvable:$true] %s190
          %s192 = sshll.u32 %s189, 4
          %196 = dma.hbm_to_vmem [thread:$0]  (%p186), %s188, %s192, %s191, %s174, 32, 32, 2
        $region32: #{tpu_custom_call.1} parent=27 // pred_fallthru
          _
      $region28: #{tpu_custom_call.1} parent=5 // pred_fallthru
        _
      %p197 = scmp.le.s32.totalorder 1, %s17
      %p198 = scmp.lt.s32.totalorder %s17, 3
      %p199 = pnand %p197, %p198
      %p200 = pneg %p199
      // Predicated region
      $region33: #{tpu_custom_call.1} parent=5 // pred_check
        _
      $region34: #{tpu_custom_call.1} parent=5 // pred_check_branch
        %202 = sbr.rel (%p199) target = $region36
      $region35: #{tpu_custom_call.1} parent=5 // pred_region
        %s203 = ssub.s32 %s17, 1
        %s204 = sand.u32 %s30, 1
        %s205 = scalar_lea.sflag [#allocation3], %s204
        %s206 = sand.u32 %s30, 1
        %s207 = smul.addr %s206, 16
        %s208 = scalar_lea.vmem [#allocation2], %s207
        // Predicated region
        $region37: #{tpu_custom_call.1} parent=35 // pred_check
          %p209 = pneg %p43
        $region38: #{tpu_custom_call.1} parent=35 // pred_check_branch
          %211 = sbr.rel (%p209) target = $region40
        $region39: #{tpu_custom_call.1} parent=35 // pred_region
          %212 = dma.done %s205, 256
        $region40: #{tpu_custom_call.1} parent=35 // pred_fallthru
          _
        // Predicated region
        $region41: #{tpu_custom_call.1} parent=35 // pred_check
          %p213 = pneg %p64
        $region42: #{tpu_custom_call.1} parent=35 // pred_check_branch
          %215 = sbr.rel (%p213) target = $region44
        $region43: #{tpu_custom_call.1} parent=35 // pred_region
          %216 = dma.done [#allocation6], 1024
        $region44: #{tpu_custom_call.1} parent=35 // pred_fallthru
          _
        %s217 = sand.u32 %s30, 1
        %s218 = scalar_lea.sflag [#allocation3], %s217
        %s219 = sand.u32 %s30, 1
        %s220 = smul.addr %s219, 16
        %s221 = scalar_lea.vmem [#allocation2], %s220
        %p222 = pneg %p43
        %p223 = pneg %p40
        %p224 = pneg %p64
        %p225 = pneg %p61
        %p226 = pneg %p85
        %p227 = pneg %p82
        %p228 = pneg %p106
        %p229 = pneg %p103
        %p230 = pneg %p132
        %p231 = pneg %p129
        %s232 = sand.u32 %s119, 1
        %s233 = scalar_lea.sflag [#allocation4], %s232
        %s234 = sand.u32 %s119, 1
        %s235 = smul.addr %s234, 64
        %s236 = scalar_lea.vmem [#allocation7], %s235
        %s237 = smul.u32 8, %s22
        %s238 = ssub.s32 10, %s237
        %p239 = scmp.lt.s32.totalorder %s238, 8
        %s240 = scalar_select %p239, %s238, 8
        %s241 = smul.u32 32, %s240
        %s242 = smul.u32 8, %s22
        %s243 = ssub.s32 10, %s242
        %p244 = scmp.lt.s32.totalorder %s243, 8
        %s245 = scalar_select %p244, %s243, 8
        %s246 = smul.u32 128, %s245
        %v248 = vld [vmem:[%s208] sm:$0x3]
        %v249 = vld [vmem:[%s208 + $0x2] sm:$0x3]
        %v250 = vld [vmem:[%s208 + $0x4] sm:$0x3]
        %v251 = vld [vmem:[%s208 + $0x6] sm:$0x3]
        %v252 = vld [vmem:[%s208 + $0x8] sm:$0x3]
        %v253 = vld [vmem:[%s208 + $0xa] sm:$0x3]
        %v254 = vld [vmem:[%s208 + $0xc] sm:$0x3]
        %v255 = vld [vmem:[%s208 + $0xe] sm:$0x3]
        %v256 = vunpack.c.l.s8.bf16 %v248
        %v257 = vunpack.c.l.s8.bf16 %v249
        %v258 = vunpack.c.l.s8.bf16 %v250
        %v259 = vunpack.c.l.s8.bf16 %v251
        %v260 = vunpack.c.l.s8.bf16 %v252
        %v261 = vunpack.c.l.s8.bf16 %v253
        %v262 = vunpack.c.l.s8.bf16 %v254
        %v263 = vunpack.c.l.s8.bf16 %v255
        %v264 = vld [vmem:[#allocation5] sm:$0xf]
        %v265 = vld [vmem:[#allocation5 + $0x4] sm:$0xf]
        %v266 = vld [vmem:[#allocation5 + $0x8] sm:$0xf]
        %v267 = vld [vmem:[#allocation5 + $0xc] sm:$0xf]
        %v268 = vld [vmem:[#allocation5 + $0x10] sm:$0xf]
        %v269 = vld [vmem:[#allocation5 + $0x14] sm:$0xf]
        %v270 = vld [vmem:[#allocation5 + $0x18] sm:$0xf]
        %v271 = vld [vmem:[#allocation5 + $0x1c] sm:$0xf]
        %v272 = vld [vmem:[#allocation5 + $0x20] sm:$0xf]
        %v273 = vld [vmem:[#allocation5 + $0x24] sm:$0xf]
        %v274 = vld [vmem:[#allocation5 + $0x28] sm:$0xf]
        %v275 = vld [vmem:[#allocation5 + $0x2c] sm:$0xf]
        %v276 = vld [vmem:[#allocation5 + $0x30] sm:$0xf]
        %v277 = vld [vmem:[#allocation5 + $0x34] sm:$0xf]
        %v278 = vld [vmem:[#allocation5 + $0x38] sm:$0xf]
        %v279 = vld [vmem:[#allocation5 + $0x3c] sm:$0xf]
        %v288 = vunpack.c.l.b16 %v256
        %v289 = vunpack.c.l.b16 %v257
        %v290 = vunpack.c.l.b16 %v258
        %v291 = vunpack.c.l.b16 %v259
        %v292 = vunpack.c.l.b16 %v260
        %v293 = vunpack.c.l.b16 %v261
        %v294 = vunpack.c.l.b16 %v262
        %v295 = vunpack.c.l.b16 %v263
        %v296 = vpack.c.b16 %v289, %v288
        %v297 = vpack.c.b16 %v291, %v290
        %v298 = vpack.c.b16 %v293, %v292
        %v299 = vpack.c.b16 %v295, %v294
        %v320 = vunpack.c.l.b16 %v264
        %v321 = vunpack.c.l.b16 %v265
        %v322 = vunpack.c.l.b16 %v266
        %v323 = vunpack.c.l.b16 %v267
        %v324 = vunpack.c.l.b16 %v268
        %v325 = vunpack.c.l.b16 %v269
        %v326 = vunpack.c.l.b16 %v270
        %v327 = vunpack.c.l.b16 %v271
        %v328 = vunpack.c.l.b16 %v272
        %v329 = vunpack.c.l.b16 %v273
        %v330 = vunpack.c.l.b16 %v274
        %v331 = vunpack.c.l.b16 %v275
        %v332 = vunpack.c.l.b16 %v276
        %v333 = vunpack.c.l.b16 %v277
        %v334 = vunpack.c.l.b16 %v278
        %v335 = vunpack.c.l.b16 %v279
        %v336 = vpack.c.b16 %v321, %v320
        %v337 = vpack.c.b16 %v323, %v322
        %v338 = vpack.c.b16 %v325, %v324
        %v339 = vpack.c.b16 %v327, %v326
        %v340 = vpack.c.b16 %v329, %v328
        %v341 = vpack.c.b16 %v331, %v330
        %v342 = vpack.c.b16 %v333, %v332
        %v343 = vpack.c.b16 %v335, %v334
        %352 = vmatprep.subr.bf16.mxu0 0
        %353 = vmatpush1.bf16.msra.mxu0 %v343
        %354 = vmatprep.subr.bf16.mxu0 0
        %355 = vmatpush1.bf16.msra.mxu0 %v342
        %356 = vmatprep.subr.bf16.mxu0 0
        %357 = vmatpush1.bf16.msra.mxu0 %v341
        %358 = vmatprep.subr.bf16.mxu0 0
        %359 = vmatpush1.bf16.msra.mxu0 %v340
        %360 = vmatprep.subr.bf16.mxu0 0
        %361 = vmatpush1.bf16.msra.mxu0 %v339
        %362 = vmatprep.subr.bf16.mxu0 0
        %363 = vmatpush1.bf16.msra.mxu0 %v338
        %364 = vmatprep.subr.bf16.mxu0 0
        %365 = vmatpush1.bf16.msra.mxu0 %v337
        %366 = vmatprep.subr.bf16.mxu0 0
        %367 = vmatpush1.bf16.msra.mxu0 %v336
        %368 = vmatprep.subr.bf16.mxu0 0
        %369 = vmatpush2.bf16.msra.mxu0 0
        %370 = vmatprep.subr.bf16.mxu0 0
        %371 = vmatpush2.bf16.msra.mxu0 0
        %372 = vmatprep.subr.bf16.mxu0 0
        %373 = vmatpush2.bf16.msra.mxu0 0
        %374 = vmatprep.subr.bf16.mxu0 0
        %375 = vmatpush2.bf16.msra.mxu0 0
        %376 = vmatprep.subr.bf16.mxu0 0
        %377 = vmatpush2.bf16.msra.mxu0 0
        %378 = vmatprep.subr.bf16.mxu0 0
        %379 = vmatpush2.bf16.msra.mxu0 0
        %380 = vmatprep.subr.bf16.mxu0 0
        %381 = vmatpush2.bf16.msra.mxu0 0
        %382 = vmatprep.subr.bf16.mxu0 0
        %383 = vmatpush2.bf16.msra.mxu0 0
        %384 = vmatprep.mubr.bf16.mxu0 0
        %385 = vmatmul.mubr.bf16.gmra.mxu0 %v296
        %v386 = vpop.f32.mrf.mxu0
        %v387 = vadd.f32 0.0, %v386
        %v388 = vpop.f32.mrf.mxu0
        %v389 = vpop.f32.mrf.mxu0
        %v390 = vadd.f32 0.0, %v389
        %v391 = vpop.f32.mrf.mxu0
        %392 = vmatprep.mubr.bf16.mxu0 0
        %393 = vmatmul.mubr.bf16.gmra.mxu0 %v297
        %v394 = vpop.f32.mrf.mxu0
        %v395 = vadd.f32 0.0, %v394
        %v396 = vpop.f32.mrf.mxu0
        %v397 = vpop.f32.mrf.mxu0
        %v398 = vadd.f32 0.0, %v397
        %v399 = vpop.f32.mrf.mxu0
        %400 = vmatprep.mubr.bf16.mxu0 0
        %401 = vmatmul.mubr.bf16.gmra.mxu0 %v298
        %v402 = vpop.f32.mrf.mxu0
        %v403 = vadd.f32 0.0, %v402
        %v404 = vpop.f32.mrf.mxu0
        %v405 = vpop.f32.mrf.mxu0
        %v406 = vadd.f32 0.0, %v405
        %v407 = vpop.f32.mrf.mxu0
        %408 = vmatprep.mubr.bf16.mxu0 0
        %409 = vmatmul.mubr.bf16.gmra.mxu0 %v299
        %v410 = vpop.f32.mrf.mxu0
        %v411 = vadd.f32 0.0, %v410
        %v412 = vpop.f32.mrf.mxu0
        %v413 = vpop.f32.mrf.mxu0
        %v414 = vadd.f32 0.0, %v413
        %v415 = vpop.f32.mrf.mxu0
        %416 = vdwg.mxu0
        %v417 = vcvt.f32.s32.to.zero.pseudo %v387
        %v418 = vcvt.f32.s32.to.zero.pseudo %v390
        %v419 = vcvt.f32.s32.to.zero.pseudo %v395
        %v420 = vcvt.f32.s32.to.zero.pseudo %v398
        %v421 = vcvt.f32.s32.to.zero.pseudo %v403
        %v422 = vcvt.f32.s32.to.zero.pseudo %v406
        %v423 = vcvt.f32.s32.to.zero.pseudo %v411
        %v424 = vcvt.f32.s32.to.zero.pseudo %v414
        %v425 = vld [vmem:[%s2] sm:$0x1]
        %v426 = vlaneseq
        %v427 = vshrl.u32 %v426, 7
        %v428 = vsub.s32 0, %v427
        %v429 = vrot.slane %v425, %v428
        %v430 = vmul.u32 %v417, %v429
        %v431 = vmul.u32 %v418, %v429
        %v432 = vmul.u32 %v419, %v429
        %v433 = vmul.u32 %v420, %v429
        %v434 = vmul.u32 %v421, %v429
        %v435 = vmul.u32 %v422, %v429
        %v436 = vmul.u32 %v423, %v429
        %v437 = vmul.u32 %v424, %v429
        %v438 = vld [vmem:[%s3] sm:$0x1]
        %v439 = vlaneseq
        %v440 = vshrl.u32 %v439, 7
        %v441 = vsub.s32 0, %v440
        %v442 = vrot.slane %v438, %v441
        %v443 = vadd.s32 %v430, %v442
        %v444 = vadd.s32 %v431, %v442
        %v445 = vadd.s32 %v432, %v442
        %v446 = vadd.s32 %v433, %v442
        %v447 = vadd.s32 %v434, %v442
        %v448 = vadd.s32 %v435, %v442
        %v449 = vadd.s32 %v436, %v442
        %v450 = vadd.s32 %v437, %v442
        %v451 = vshra.s32 %v443, 8
        %v452 = vshra.s32 %v444, 8
        %v453 = vshra.s32 %v445, 8
        %v454 = vshra.s32 %v446, 8
        %v455 = vshra.s32 %v447, 8
        %v456 = vshra.s32 %v448, 8
        %v457 = vshra.s32 %v449, 8
        %v458 = vshra.s32 %v450, 8
        %vm459 = vcmp.gt.s32.totalorder %v451, 0
        %v460 = vsel %vm459, %v451, 0
        %vm461 = vcmp.gt.s32.totalorder %v452, 0
        %v462 = vsel %vm461, %v452, 0
        %vm463 = vcmp.gt.s32.totalorder %v453, 0
        %v464 = vsel %vm463, %v453, 0
        %vm465 = vcmp.gt.s32.totalorder %v454, 0
        %v466 = vsel %vm465, %v454, 0
        %vm467 = vcmp.gt.s32.totalorder %v455, 0
        %v468 = vsel %vm467, %v455, 0
        %vm469 = vcmp.gt.s32.totalorder %v456, 0
        %v470 = vsel %vm469, %v456, 0
        %vm471 = vcmp.gt.s32.totalorder %v457, 0
        %v472 = vsel %vm471, %v457, 0
        %vm473 = vcmp.gt.s32.totalorder %v458, 0
        %v474 = vsel %vm473, %v458, 0
        %vm475 = vcmp.lt.s32.totalorder %v460, 127
        %v476 = vsel %vm475, %v460, 127
        %vm477 = vcmp.lt.s32.totalorder %v462, 127
        %v478 = vsel %vm477, %v462, 127
        %vm479 = vcmp.lt.s32.totalorder %v464, 127
        %v480 = vsel %vm479, %v464, 127
        %vm481 = vcmp.lt.s32.totalorder %v466, 127
        %v482 = vsel %vm481, %v466, 127
        %vm483 = vcmp.lt.s32.totalorder %v468, 127
        %v484 = vsel %vm483, %v468, 127
        %vm485 = vcmp.lt.s32.totalorder %v470, 127
        %v486 = vsel %vm485, %v470, 127
        %vm487 = vcmp.lt.s32.totalorder %v472, 127
        %v488 = vsel %vm487, %v472, 127
        %vm489 = vcmp.lt.s32.totalorder %v474, 127
        %v490 = vsel %vm489, %v474, 127
        %v491 = vcvt.s32.f32 %v476
        %v492 = vcvt.s32.f32 %v478
        %v493 = vcvt.s32.f32 %v480
        %v494 = vcvt.s32.f32 %v482
        %v495 = vcvt.s32.f32 %v484
        %v496 = vcvt.s32.f32 %v486
        %v497 = vcvt.s32.f32 %v488
        %v498 = vcvt.s32.f32 %v490
        %499 = vst [vmem:[%s236] sm:$0xff] %v491
        %500 = vst [vmem:[%s236 + $0x8] sm:$0xff] %v492
        %501 = vst [vmem:[%s236 + $0x10] sm:$0xff] %v493
        %502 = vst [vmem:[%s236 + $0x18] sm:$0xff] %v494
        %503 = vst [vmem:[%s236 + $0x20] sm:$0xff] %v495
        %504 = vst [vmem:[%s236 + $0x28] sm:$0xff] %v496
        %505 = vst [vmem:[%s236 + $0x30] sm:$0xff] %v497
        %506 = vst [vmem:[%s236 + $0x38] sm:$0xff] %v498
        %s507 = sand.u32 %s119, 1
        %s508 = scalar_lea.sflag [#allocation4], %s507
        %s509 = sand.u32 %s119, 1
        %s510 = smul.addr %s509, 64
        %s511 = scalar_lea.vmem [#allocation7], %s510
        // Predicated region
        $region45: #{tpu_custom_call.1} parent=35 // pred_check
          %p512 = pneg %p129
        $region46: #{tpu_custom_call.1} parent=35 // pred_check_branch
          %514 = sbr.rel (%p512) target = $region48
        $region47: #{tpu_custom_call.1} parent=35 // pred_region
          %s515 = smul.u32 8, %s22
          %s516 = ssub.s32 10, %s515
          %p517 = scmp.lt.s32.totalorder %s516, 8
          %s518 = scalar_select %p517, %s516, 8
          %s519 = smul.u32 128, %s518
          %s521 = ssub.s32 1024, %s519
          %522 = vsyncadd %s508, %s521
          %p523 = scmp.ne.s32.totalorder 0, %s519
          %s524 = smul.addr %s515, 128
          %s525 = scalar_lea.hbm %s4, %s524
          %s526 = smul.u32 8, %s518
          %s527 = sshll.u32 %s511, 4
          %s528 = int_to_ptr.vmem [resolvable:$true] %s527
          %s529 = sshll.u32 %s526, 4
          %533 = dma.vmem_to_hbm [thread:$0]  (%p523), %s528, %s529, %s525, %s508, 128, 128, 8
        $region48: #{tpu_custom_call.1} parent=35 // pred_fallthru
          _
      $region36: #{tpu_custom_call.1} parent=5 // pred_fallthru
        _
      %p534 = scmp.le.s32.totalorder 2, %s17
      // Predicated region
      $region49: #{tpu_custom_call.1} parent=5 // pred_check
        %p535 = pneg %p534
      $region50: #{tpu_custom_call.1} parent=5 // pred_check_branch
        %537 = sbr.rel (%p535) target = $region52
      $region51: #{tpu_custom_call.1} parent=5 // pred_region
        %s538 = ssub.s32 %s17, 2
        // Predicated region
        $region53: #{tpu_custom_call.1} parent=51 // pred_check
          %p539 = pneg %p135
        $region54: #{tpu_custom_call.1} parent=51 // pred_check_branch
          %541 = sbr.rel (%p539) target = $region56
        $region55: #{tpu_custom_call.1} parent=51 // pred_region
          %s542 = sand.u32 %s120, 1
          %s543 = scalar_lea.sflag [#allocation4], %s542
          %s544 = sand.u32 %s120, 1
          %s545 = smul.addr %s544, 64
          %s546 = scalar_lea.vmem [#allocation7], %s545
          %547 = dma.done %s543, 1024
        $region56: #{tpu_custom_call.1} parent=51 // pred_fallthru
          _
      $region52: #{tpu_custom_call.1} parent=5 // pred_fallthru
        _
    $region6: #{tpu_custom_call.1} parent=1 // loop_footer
      %s21 = sadd.s32 1, %s17
    $region7: #{tpu_custom_call.1} parent=1 // loop_footer_branch
      %16 = sbr.rel target = $region3
    $region8: #{tpu_custom_call.1} parent=1 // loop_exit
      _
    %548 = vsyncpa [#allocation3], 1
    %s549 = scalar_lea.sflag [#allocation3], 1
    %550 = vsyncpa %s549, 1
    %551 = vsyncpa [#allocation6], 1
    %552 = vsyncpa [#allocation4], 1
    %s553 = scalar_lea.sflag [#allocation4], 1
    %554 = vsyncpa %s553, 1

</llo_original>
